<compile_context>
chip_gen: v7x
topology: tpu7x:2x2x1
jax: 0.10.0
libtpu: 0.0.40
codegen_flags: <defaults>
</compile_context>

<pallas_src>
import functools

import jax
import jax.numpy as jnp
from jax.experimental import pallas as pl
from jax.experimental.pallas import tpu as pltpu

_MIB = 1024 * 1024


def _round_up(x: int, m: int) -> int:
    return (x + m - 1) // m * m


def _sublane(dtype) -> int:
    # Packed sub-32-bit dtypes need taller minimum tiles along the sublane dim.
    return {4: 8, 2: 16, 1: 32}.get(jnp.dtype(dtype).itemsize, 8)


def _largest_tile(dim_aligned: int, align: int, cap: int) -> int:
    """Largest multiple of `align` that divides `dim_aligned` and is <= cap."""
    t = (min(cap, dim_aligned) // align) * align
    while t > align:
        if dim_aligned % t == 0:
            return t
        t -= align
    return align


def _tpu_params():
    """(working-set budget, vmem_limit cap, is_v7x) for the local TPU gen."""
    try:
        kind = jax.devices()[0].device_kind.lower()
    except Exception:
        kind = ""
    is_v7 = ("v7" in kind) or ("7x" in kind)
    if is_v7:                                   # 64 MiB VMEM per core
        return 44 * _MIB, 56 * _MIB, True
    if ("v2" in kind) or ("v3" in kind):        # 16 MiB VMEM per core
        return 10 * _MIB, 14 * _MIB, False
    if any(g in kind for g in ("v4", "v5", "v6")):   # 128 MiB per core
        return 88 * _MIB, 100 * _MIB, False
    return 44 * _MIB, 56 * _MIB, False          # unknown: be conservative


def _make_kernel(use_scratch: bool):
    """One (tm, tn) output tile; K is the innermost (reduction) grid axis."""

    def kernel(x_ref, w_ref, o_ref, *scratch):
        # f32 output: accumulate directly into the VMEM-resident output block.
        acc_ref = scratch[0] if use_scratch else o_ref
        kk = pl.program_id(2)

        @pl.when(kk == 0)
        def _init():
            acc_ref[...] = jnp.zeros_like(acc_ref)

        acc_ref[...] += jnp.dot(
            x_ref[...], w_ref[...], preferred_element_type=jnp.float32
        )

        if use_scratch:
            @pl.when(kk == pl.num_programs(2) - 1)
            def _finalize():
                o_ref[...] = acc_ref[...].astype(o_ref.dtype)

    return kernel


@functools.partial(
    jax.jit, static_argnames=("tm", "tn", "tk", "cast_inputs_to_bf16")
)
def linear_forward(x, w, *, tm=None, tn=None, tk=None,
                   cast_inputs_to_bf16: bool = False):
    """Pallas equivalent of Layer.forward: out = x @ w (no bias)."""
    m, k = x.shape
    k2, n = w.shape
    assert k == k2, "feature dims must match"

    # Output dtype follows torch.mm of the ORIGINAL inputs.
    out_dtype = jnp.result_type(x.dtype, w.dtype)

    if cast_inputs_to_bf16 and x.dtype == jnp.float32:
        # MXU ingests bf16 natively; accumulation stays f32 inside the kernel.
        x = x.astype(jnp.bfloat16)
        w = w.astype(jnp.bfloat16)

    x_it = jnp.dtype(x.dtype).itemsize
    w_it = jnp.dtype(w.dtype).itemsize
    o_it = jnp.dtype(out_dtype).itemsize
    use_scratch = out_dtype != jnp.float32

    # Alignment: lane dims need 128, sublane dims depend on dtype packing.
    sub = _sublane(x.dtype)
    m_al = _round_up(m, sub)
    n_al = _round_up(n, 128)
    k_al = _round_up(k, 128)

    budget, limit_cap, is_v7 = _tpu_params()

    # Target tiles (big enough to approach the HBM roofline); on 128 MiB-VMEM
    # generations push the weight/N tile further to cut x re-streaming.
    tm_t = tm if tm is not None else 512
    tn_t = tn if tn is not None else (2048 if budget > 48 * _MIB else 1024)
    tk_t = tk if tk is not None else 2048

    # Divisor-aware effective tiles: padding is only ever to the alignment
    # boundary, never up to a full tile (N=384 -> tn=384, not padded to 512).
    tm_e = _largest_tile(m_al, sub, tm_t)
    tn_e = _largest_tile(n_al, 128, tn_t)
    tk_e = _largest_tile(k_al, 128, tk_t)

    # v7x has two TensorCores: make sure a "parallel" axis has >= 2 blocks.
    if is_v7 and (m_al // tm_e) * (n_al // tn_e) == 1:
        if n_al >= 2 * 128:
            tn_e = _largest_tile(n_al, 128, n_al // 2)
        elif m_al >= 2 * sub:
            tm_e = _largest_tile(m_al, sub, m_al // 2)

    def working_set(tm_, tn_, tk_):
        ws = 2 * (tm_ * tk_ * x_it + tk_ * tn_ * w_it + tm_ * tn_ * o_it)
        if use_scratch:
            ws += tm_ * tn_ * 4
        return ws

    # Shrink (tk, then tn, then tm) until the double-buffered working set fits
    # the per-generation VMEM budget.
    while working_set(tm_e, tn_e, tk_e) > budget:
        if tk_e > 128:
            tk_e = _largest_tile(k_al, 128, tk_e // 2)
        elif tn_e > 128:
            tn_e = _largest_tile(n_al, 128, tn_e // 2)
        elif tm_e > sub:
            tm_e = _largest_tile(m_al, sub, tm_e // 2)
        else:
            break

    grid_m = m_al // tm_e
    grid_n = n_al // tn_e
    grid_k = k_al // tk_e

    ws = working_set(tm_e, tn_e, tk_e)
    vmem_limit = int(min(limit_cap, max(32 * _MIB, ws + 8 * _MIB)))

    # Zero-pad only the alignment remainder (zeros in K keep the reduction
    # exact; padded M/N rows/cols are sliced off at the end). 128-multiple
    # shapes skip this entirely.
    if (m_al, k_al) != (m, k):
        x = jnp.pad(x, ((0, m_al - m), (0, k_al - k)))
    if (k_al, n_al) != (k, n):
        w = jnp.pad(w, ((0, k_al - k), (0, n_al - n)))

    x_spec = pl.BlockSpec((tm_e, tk_e), lambda i, j, kk: (i, kk))
    w_spec = pl.BlockSpec((tk_e, tn_e), lambda i, j, kk: (kk, j))
    # Same (i, j) output block for every kk -> stays VMEM-resident and (for
    # f32 outputs) doubles as the accumulator.
    o_spec = pl.BlockSpec((tm_e, tn_e), lambda i, j, kk: (i, j))

    scratch = [pltpu.VMEM((tm_e, tn_e), jnp.float32)] if use_scratch else []

    # Honest traffic estimate: x is re-read once per N tile, w once per M tile.
    cost = pl.CostEstimate(
        flops=2 * m_al * n_al * k_al,
        transcendentals=0,
        bytes_accessed=(
            grid_n * m_al * k_al * x_it
            + grid_m * k_al * n_al * w_it
            + m_al * n_al * o_it
        ),
    )

    out_padded = pl.pallas_call(
        _make_kernel(use_scratch),
        out_shape=jax.ShapeDtypeStruct((m_al, n_al), out_dtype),
        grid=(grid_m, grid_n, grid_k),
        in_specs=[x_spec, w_spec],
        out_specs=o_spec,
        scratch_shapes=scratch,
        compiler_params=pltpu.CompilerParams(
            dimension_semantics=("parallel", "parallel", "arbitrary"),
            vmem_limit_bytes=vmem_limit,
        ),
        cost_estimate=cost,
    )(x, w)

    if (m_al, n_al) != (m, n):
        out_padded = out_padded[:m, :n]
    return out_padded


if __name__ == "__main__":
    key = jax.random.PRNGKey(0)
    kx, kw, k2a, k2b, k3a, k3b = jax.random.split(key, 6)

    # 1) Layer(i_n_features_input=32, i_n_features_output=16), batch of 8.
    batch, n_in, n_out = 8, 32, 16
    x = jax.random.normal(kx, (batch, n_in), dtype=jnp.float32)
    w = jax.random.normal(kw, (n_in, n_out), dtype=jnp.float32) * 0.1
    out = linear_forward(x, w)
    jax.block_until_ready(out)
    assert out.shape == (batch, n_out)
    assert jnp.allclose(out, x @ w, atol=1e-5, rtol=1e-5)

    # 2) Multi-block grid (M, N and K all tiled) with direct-into-output f32
    #    accumulation; N=384 stays un-padded thanks to divisor-aware tn.
    m2, k2, n2 = 256, 512, 384
    x2 = jax.random.normal(k2a, (m2, k2), dtype=jnp.float32)
    w2 = jax.random.normal(k2b, (k2, n2), dtype=jnp.float32) * 0.05
    out2 = linear_forward(x2, w2, tm=128, tn=128, tk=128)
    jax.block_until_ready(out2)
    ref2 = jnp.dot(x2, w2, preferred_element_type=jnp.float32)
    assert out2.shape == (m2, n2)
    assert jnp.allclose(out2, ref2, atol=1e-3, rtol=1e-3)

    # 3) bf16 inputs -> bf16 output: exercises the f32-scratch accumulator path.
    m3, k3, n3 = 64, 256, 256
    x3 = jax.random.normal(k3a, (m3, k3), dtype=jnp.float32).astype(jnp.bfloat16)
    w3 = (jax.random.normal(k3b, (k3, n3), dtype=jnp.float32) * 0.05).astype(jnp.bfloat16)
    out3 = linear_forward(x3, w3, tk=128)
    jax.block_until_ready(out3)
    ref3 = jnp.dot(x3.astype(jnp.float32), w3.astype(jnp.float32))
    assert out3.dtype == jnp.bfloat16
    assert jnp.allclose(out3.astype(jnp.float32), ref3, atol=5e-2, rtol=5e-2)

    # 4) f32 inputs fed to the MXU as bf16 (f32 accumulation, f32 output).
    x4 = x3.astype(jnp.float32)
    w4 = w3.astype(jnp.float32)
    out4 = linear_forward(x4, w4, cast_inputs_to_bf16=True)
    jax.block_until_ready(out4)
    ref4 = jnp.dot(x4, w4)
    assert out4.dtype == jnp.float32
    assert jnp.allclose(out4, ref4, atol=1e-1, rtol=5e-2)

    # TODO(synk): backward pass (grad_input = g @ w.T, grad_weights = x.T @ g)
    # is handled by JAX autodiff of this forward in practice; not re-implemented.
    print("KERNEL_OK")
</pallas_src>

<mosaic_0001>
module attributes {stable_mosaic.version = 11 : i64} {
  func.func @kernel(%arg0: i32, %arg1: i32, %arg2: i32, %arg3: memref<8x128xf32, #tpu.memory_space<vmem>>, %arg4: memref<128x128xf32, #tpu.memory_space<vmem>>, %arg5: memref<8x128xf32, #tpu.memory_space<vmem>>) attributes {dimension_semantics = [#tpu.dimension_semantics<parallel>, #tpu.dimension_semantics<parallel>, #tpu.dimension_semantics<arbitrary>], iteration_bounds = array<i64: 1, 1, 1>, scalar_prefetch = 0 : i64, scratch_operands = 0 : i64, tpu.core_type = #tpu.core_type<tc>, window_params = [{transform_indices = @transform_0, window_bounds = array<i64: 8, 128>}, {transform_indices = @transform_1, window_bounds = array<i64: 128, 128>}, {transform_indices = @transform_2, window_bounds = array<i64: 8, 128>}]} {
    %c0_i32 = arith.constant 0 : i32
    %0 = arith.cmpi eq, %arg2, %c0_i32 : i32
    %1 = arith.extui %0 : i1 to i32
    %c0_i32_0 = arith.constant 0 : i32
    %2 = arith.cmpi ne, %1, %c0_i32_0 : i32
    scf.if %2 {
      %cst_8 = arith.constant 0.000000e+00 : f32
      %9 = vector.broadcast %cst_8 : f32 to vector<8x128xf32>
      %c0_9 = arith.constant 0 : index
      %c0_10 = arith.constant 0 : index
      %10 = vector.load %arg5[%c0_9, %c0_10] : memref<8x128xf32, #tpu.memory_space<vmem>>, vector<8x128xf32>
      tpu.vector_store %arg5[%c0_9, %c0_10], %9 {strides = array<i32>} : memref<8x128xf32, #tpu.memory_space<vmem>>, vector<8x128xf32>,
    } else {
    }
    %c0 = arith.constant 0 : index
    %c0_1 = arith.constant 0 : index
    %3 = vector.load %arg5[%c0, %c0_1] : memref<8x128xf32, #tpu.memory_space<vmem>>, vector<8x128xf32>
    %c0_2 = arith.constant 0 : index
    %c0_3 = arith.constant 0 : index
    %4 = vector.load %arg3[%c0_2, %c0_3] : memref<8x128xf32, #tpu.memory_space<vmem>>, vector<8x128xf32>
    %c0_4 = arith.constant 0 : index
    %c0_5 = arith.constant 0 : index
    %5 = vector.load %arg4[%c0_4, %c0_5] : memref<128x128xf32, #tpu.memory_space<vmem>>, vector<128x128xf32>
    %cst = arith.constant dense<0.000000e+00> : vector<8x128xf32>
    %6 = tpu.matmul %4, %5, %cst {dimension_numbers = #tpu.dot_dimension_numbers<[1], [0], [0], [1], [0, 0, 1, 1], [], []>} : vector<8x128xf32>, vector<128x128xf32>, vector<8x128xf32> -> vector<8x128xf32>
    %7 = arith.addf %3, %6 : vector<8x128xf32>
    %c0_6 = arith.constant 0 : index
    %c0_7 = arith.constant 0 : index
    %8 = vector.load %arg5[%c0_6, %c0_7] : memref<8x128xf32, #tpu.memory_space<vmem>>, vector<8x128xf32>
    tpu.vector_store %arg5[%c0_6, %c0_7], %7 {strides = array<i32>} : memref<8x128xf32, #tpu.memory_space<vmem>>, vector<8x128xf32>,
    return
  }
  func.func @transform_0(%arg0: i32, %arg1: i32, %arg2: i32) -> (i32, i32) {
    %c0_i32 = arith.constant 0 : i32
    return %arg0, %arg2 : i32, i32
  }
  func.func @transform_1(%arg0: i32, %arg1: i32, %arg2: i32) -> (i32, i32) {
    %c0_i32 = arith.constant 0 : i32
    return %arg2, %arg1 : i32, i32
  }
  func.func @transform_2(%arg0: i32, %arg1: i32, %arg2: i32) -> (i32, i32) {
    %c0_i32 = arith.constant 0 : i32
    return %arg0, %arg1 : i32, i32
  }
}

</mosaic_0001>

<llo_original>
// kernel: linear_forward.1
$region0: #{linear_forward.1}
  #allocation0 [shape = 'u32[]', space=smem, size = 0x4, offset = 0x4, fixed_abs, tag = 'smem constant byte address 0x4 - core index']
  #allocation1 [shape = 'u32[144,128]{1,0:T(1,128)}', space=vmem, size = 0x12000, scoped, tag = 'internal scratch']
  %s0 = inlined_call_operand.vmem [shape: f32[8,128], index: 0, kind: input, shape index: {}]
  %s1 = inlined_call_operand.vmem [shape: f32[128,128], index: 1, kind: input, shape index: {}]
  %s2 = inlined_call_operand.hbm [shape: f32[8,128], index: 2, kind: output, shape index: {}]
  %s3 = sld [smem:[#allocation0]]
  $region22: #{linear_forward.1} parent=0
    _
  %s5 = ssub.s32 1, %s3
  %s6 = scalar_select 0, %s5, %s3
  $region1: #{linear_forward.1} parent=0
    #allocation2 [shape = 'u8[4096]{0}', space=vmem, size = 0x1000, scoped, tag = 'output window, operand 0, single buffered']
    #allocation3 [shape = 's32[1]{0}', space=sflag, size = 0x4, scoped, tag = 'scoped memory for linear_forward.1']
    %7 = vsyncpa [#allocation3], 0
    // Predicated region
    $region2: #{linear_forward.1} parent=1 // pred_check
      _
    $region3: #{linear_forward.1} parent=1 // pred_check_branch
      %9 = sbr.rel (0) target = $region5
    $region4: #{linear_forward.1} parent=1 // pred_region
      _
    $region5: #{linear_forward.1} parent=1 // pred_fallthru
      _
    // Predicated region
    $region6: #{linear_forward.1} parent=1 // pred_check
      _
    $region7: #{linear_forward.1} parent=1 // pred_check_branch
      %11 = sbr.rel (0) target = $region9
    $region8: #{linear_forward.1} parent=1 // pred_region
      _
    $region9: #{linear_forward.1} parent=1 // pred_fallthru
      _
    %p12 = scmp.eq.s32.totalorder 0, 0
    // Predicated region
    $region10: #{linear_forward.1} parent=1 // pred_check
      %p13 = pneg %p12
    $region11: #{linear_forward.1} parent=1 // pred_check_branch
      %15 = sbr.rel (%p13) target = $region13
    $region12: #{linear_forward.1} parent=1 // pred_region
      %16 = vst [vmem:[#allocation2] sm:$0xff] 0.0
    $region13: #{linear_forward.1} parent=1 // pred_fallthru
      _
    %v17 = vld [vmem:[#allocation2] sm:$0xff]
    %v18 = vld [vmem:[%s0] sm:$0xff]
    %v19 = vld [vmem:[%s1] sm:$0xff]
    %v20 = vld [vmem:[%s1 + $0x8] sm:$0xff]
    %v21 = vld [vmem:[%s1 + $0x10] sm:$0xff]
    %v22 = vld [vmem:[%s1 + $0x18] sm:$0xff]
    %v23 = vld [vmem:[%s1 + $0x20] sm:$0xff]
    %v24 = vld [vmem:[%s1 + $0x28] sm:$0xff]
    %v25 = vld [vmem:[%s1 + $0x30] sm:$0xff]
    %v26 = vld [vmem:[%s1 + $0x38] sm:$0xff]
    %v27 = vld [vmem:[%s1 + $0x40] sm:$0xff]
    %v28 = vld [vmem:[%s1 + $0x48] sm:$0xff]
    %v29 = vld [vmem:[%s1 + $0x50] sm:$0xff]
    %v30 = vld [vmem:[%s1 + $0x58] sm:$0xff]
    %v31 = vld [vmem:[%s1 + $0x60] sm:$0xff]
    %v32 = vld [vmem:[%s1 + $0x68] sm:$0xff]
    %v33 = vld [vmem:[%s1 + $0x70] sm:$0xff]
    %v34 = vld [vmem:[%s1 + $0x78] sm:$0xff]
    %35 = vmatprep.subr.mxu0 0.0
    %36 = vmatpush1.msra.mxu0 %v19
    %37 = vmatprep.subr.mxu0 0.0
    %38 = vmatpush1.msra.mxu0 %v20
    %39 = vmatprep.subr.mxu0 0.0
    %40 = vmatpush1.msra.mxu0 %v21
    %41 = vmatprep.subr.mxu0 0.0
    %42 = vmatpush1.msra.mxu0 %v22
    %43 = vmatprep.subr.mxu0 0.0
    %44 = vmatpush1.msra.mxu0 %v23
    %45 = vmatprep.subr.mxu0 0.0
    %46 = vmatpush1.msra.mxu0 %v24
    %47 = vmatprep.subr.mxu0 0.0
    %48 = vmatpush1.msra.mxu0 %v25
    %49 = vmatprep.subr.mxu0 0.0
    %50 = vmatpush1.msra.mxu0 %v26
    %51 = vmatprep.subr.mxu0 0.0
    %52 = vmatpush1.msra.mxu0 %v27
    %53 = vmatprep.subr.mxu0 0.0
    %54 = vmatpush1.msra.mxu0 %v28
    %55 = vmatprep.subr.mxu0 0.0
    %56 = vmatpush1.msra.mxu0 %v29
    %57 = vmatprep.subr.mxu0 0.0
    %58 = vmatpush1.msra.mxu0 %v30
    %59 = vmatprep.subr.mxu0 0.0
    %60 = vmatpush1.msra.mxu0 %v31
    %61 = vmatprep.subr.mxu0 0.0
    %62 = vmatpush1.msra.mxu0 %v32
    %63 = vmatprep.subr.mxu0 0.0
    %64 = vmatpush1.msra.mxu0 %v33
    %65 = vmatprep.subr.mxu0 0.0
    %66 = vmatpush1.msra.mxu0 %v34
    %67 = vmatprep.subr.mxu0 0.0
    %68 = vmatpush1.msra.mxu0 0.0
    %69 = vmatprep.subr.mxu0 0.0
    %70 = vmatpush1.msra.mxu0 0.0
    %71 = vmatprep.subr.mxu0 0.0
    %72 = vmatpush1.msra.mxu0 0.0
    %73 = vmatprep.subr.mxu0 0.0
    %74 = vmatpush1.msra.mxu0 0.0
    %75 = vmatprep.subr.mxu0 0.0
    %76 = vmatpush1.msra.mxu0 0.0
    %77 = vmatprep.subr.mxu0 0.0
    %78 = vmatpush1.msra.mxu0 0.0
    %79 = vmatprep.subr.mxu0 0.0
    %80 = vmatpush1.msra.mxu0 0.0
    %81 = vmatprep.subr.mxu0 0.0
    %82 = vmatpush1.msra.mxu0 0.0
    %83 = vmatprep.subr.mxu0 0.0
    %84 = vmatpush1.msra.mxu0 0.0
    %85 = vmatprep.subr.mxu0 0.0
    %86 = vmatpush1.msra.mxu0 0.0
    %87 = vmatprep.subr.mxu0 0.0
    %88 = vmatpush1.msra.mxu0 0.0
    %89 = vmatprep.subr.mxu0 0.0
    %90 = vmatpush1.msra.mxu0 0.0
    %91 = vmatprep.subr.mxu0 0.0
    %92 = vmatpush1.msra.mxu0 0.0
    %93 = vmatprep.subr.mxu0 0.0
    %94 = vmatpush1.msra.mxu0 0.0
    %95 = vmatprep.subr.mxu0 0.0
    %96 = vmatpush1.msra.mxu0 0.0
    %97 = vmatprep.subr.mxu0 0.0
    %98 = vmatpush1.msra.mxu0 0.0
    %99 = vmatprep.mubr.f32.mxu0 0.0
    %100 = vmatmul.mubr.f32.gmra.mrb[0].mxu0 %v18
    %v101 = vpop.f32.mrb[0].mxu0
    %v102 = vadd.f32 0.0, %v101
    %v103 = vpop.f32.mrb[0].mxu0
    %104 = vdwg.mxu0
    %v105 = vadd.f32 %v17, %v102
    %106 = vst [vmem:[#allocation2] sm:$0xff] %v105
    // Predicated region
    $region14: #{linear_forward.1} parent=1 // pred_check
      _
    $region15: #{linear_forward.1} parent=1 // pred_check_branch
      %108 = sbr.rel (0) target = $region17
    $region16: #{linear_forward.1} parent=1 // pred_region
      %s110 = ssub.s32 128, 128
      %111 = vsyncadd [#allocation3], %s110
      %s113 = sshll.u32 [#allocation2], 4
      %s114 = int_to_ptr.vmem [resolvable:$true] %s113
      %116 = dma.vmem_to_hbm [thread:$0]  %s114, 128, %s2, [#allocation3]
    $region17: #{linear_forward.1} parent=1 // pred_fallthru
      _
    // Predicated region
    $region18: #{linear_forward.1} parent=1 // pred_check
      _
    $region19: #{linear_forward.1} parent=1 // pred_check_branch
      %118 = sbr.rel (0) target = $region21
    $region20: #{linear_forward.1} parent=1 // pred_region
      %119 = dma.done [#allocation3], 128
    $region21: #{linear_forward.1} parent=1 // pred_fallthru
      _
    %120 = vsyncpa [#allocation3], 1

</llo_original>
